<compile_context>
chip_gen: v5e
topology: v5e:2x2
jax: 0.10.0
libtpu: 0.0.40
codegen_flags: <defaults>
</compile_context>

<pallas_src>
import functools

import jax
import jax.numpy as jnp
from jax.experimental import pallas as pl
from jax.experimental.pallas import tpu as pltpu

EPS = 1e-5


def prenorm_linear_kernel(x_ref, w_ref, b_ref, o_ref, *, n_rows, block_rows,
                          mask_rows):
    # x_ref: (tm, D) tile of token rows
    # w_ref: (D, D) folded weight (in, out); grid-invariant, single-buffered
    # b_ref: (1, D) folded bias (f32); grid-invariant, single-buffered
    x = x_ref[...].astype(jnp.float32)

    if mask_rows:
        # Last grid step over-covers the row count; zero the garbage rows
        # before the reductions so no inf/NaN can appear.  Their outputs are
        # dropped anyway by the masked edge-block store.
        row0 = pl.program_id(0) * block_rows
        rows = jax.lax.broadcasted_iota(jnp.int32, (x.shape[0], 1), 0) + row0
        x = jnp.where(rows < n_rows, x, 0.0)

    inv_d = jnp.float32(1.0 / x.shape[-1])

    # --- LayerNorm statistics in f32 (biased variance, PyTorch semantics) ---
    mean = jnp.sum(x, axis=-1, keepdims=True) * inv_d
    centered = x - mean
    var = jnp.sum(centered * centered, axis=-1, keepdims=True) * inv_d
    xhat = centered * jax.lax.rsqrt(var + EPS)

    # --- folded Linear: xhat @ W' + b'  (gamma already folded into W') ---
    y = xhat.astype(w_ref.dtype)          # bf16 weights -> native MXU path
    out = jnp.dot(y, w_ref[...], preferred_element_type=jnp.float32)
    out = out + b_ref[...]

    o_ref[...] = out.astype(o_ref.dtype)


def _round_up(a, b):
    return pl.cdiv(a, b) * b


def prenorm_linear(x, gamma, beta, w_in_out, b, *, tm=512, mxu_dtype=None):
    """PreNorm(dim, Linear(dim, dim)) forward.

    x: (B, S, D); gamma/beta/b: (D,); w_in_out: (D, D) laid out (in, out).
    tm: rows of x per grid step (512 is a good default on v5e/v6e; v7x
        tolerates 1024+ at these D).
    mxu_dtype: dtype the folded weight / xhat are fed to the MXU in.
        Default: bfloat16 when x is bfloat16, else keep the weight dtype.
    """
    B, S, D = x.shape
    n = B * S
    x2 = x.reshape(n, D)

    if mxu_dtype is None:
        mxu_dtype = jnp.bfloat16 if x.dtype == jnp.bfloat16 else w_in_out.dtype

    # Fold the LayerNorm affine into the linear (done once, plain JAX):
    #   (xhat*gamma + beta) @ W + b == xhat @ (gamma[:,None]*W) + (beta@W + b)
    w_f32 = w_in_out.astype(jnp.float32)
    w_folded = (gamma.astype(jnp.float32)[:, None] * w_f32).astype(mxu_dtype)
    b_folded = (beta.astype(jnp.float32) @ w_f32
                + b.astype(jnp.float32)).reshape(1, D)

    # Effective row tile: as large as requested but no larger than the
    # 8-aligned row count.  If that would leave a single grid step and there
    # is more than one 8-row tile of work, split into >= 2 steps so the
    # "parallel" row axis can use both v7x TensorCores.
    n_aligned = _round_up(n, 8)
    tm_eff = _round_up(min(tm, n_aligned), 8)
    if pl.cdiv(n, tm_eff) < 2 and n_aligned > 8:
        tm_eff = _round_up(pl.cdiv(n, 2), 8)
    grid_rows = pl.cdiv(n, tm_eff)

    # No jnp.pad: the last block may over-cover; OOB rows are masked in-kernel
    # and OOB output writes are dropped by Pallas.
    mask_rows = (n % tm_eff) != 0

    kernel = functools.partial(prenorm_linear_kernel, n_rows=n,
                               block_rows=tm_eff, mask_rows=mask_rows)

    invariant = pl.Buffered(1)   # grid-invariant operands: single-buffer them

    out = pl.pallas_call(
        kernel,
        out_shape=jax.ShapeDtypeStruct((n, D), x.dtype),
        grid_spec=pltpu.PrefetchScalarGridSpec(
            num_scalar_prefetch=0,
            grid=(grid_rows,),
            in_specs=[
                pl.BlockSpec((tm_eff, D), lambda i: (i, 0)),        # x rows
                pl.BlockSpec((D, D), lambda i: (0, 0),
                             pipeline_mode=invariant),              # folded W
                pl.BlockSpec((1, D), lambda i: (0, 0),
                             pipeline_mode=invariant),              # folded b
            ],
            out_specs=pl.BlockSpec((tm_eff, D), lambda i: (i, 0)),
        ),
        compiler_params=pltpu.CompilerParams(
            dimension_semantics=("parallel",),
        ),
    )(x2, w_folded, b_folded)

    return out.reshape(B, S, D)


def reference(x, gamma, beta, w_in_out, b):
    xf = x.astype(jnp.float32)
    mean = jnp.mean(xf, axis=-1, keepdims=True)
    var = jnp.mean((xf - mean) ** 2, axis=-1, keepdims=True)
    xhat = (xf - mean) / jnp.sqrt(var + EPS)
    y = xhat * gamma + beta
    return (y @ w_in_out + b).astype(x.dtype)


if __name__ == "__main__":
    # Small but lane-dense shape: batch=2, seq=8, dim=128.
    B, S, D = 2, 8, 128

    key = jax.random.PRNGKey(0)
    kx, kg, kb, kw, kbias, kx2 = jax.random.split(key, 6)

    x = jax.random.normal(kx, (B, S, D), dtype=jnp.float32)
    gamma = 1.0 + 0.1 * jax.random.normal(kg, (D,), dtype=jnp.float32)
    beta = 0.1 * jax.random.normal(kb, (D,), dtype=jnp.float32)
    # fn = Linear(D, D): PyTorch stores W as (out, in); pre-transpose to (in, out).
    w_out_in = jax.random.normal(kw, (D, D), dtype=jnp.float32) * (1.0 / jnp.sqrt(D))
    w_in_out = w_out_in.T
    bias = 0.01 * jax.random.normal(kbias, (D,), dtype=jnp.float32)

    ref = reference(x, gamma, beta, w_in_out, bias)

    # 1) f32 path, strict tolerance.
    out = jax.block_until_ready(prenorm_linear(x, gamma, beta, w_in_out, bias))
    assert out.shape == (B, S, D)
    assert jnp.allclose(out, ref, atol=2e-4, rtol=2e-4), (
        f"f32 max err {jnp.max(jnp.abs(out - ref))}")

    # 2) bf16-weight MXU path (looser tolerance: bf16 rounding of W and xhat).
    out_bw = jax.block_until_ready(
        prenorm_linear(x, gamma, beta, w_in_out, bias, mxu_dtype=jnp.bfloat16))
    assert jnp.allclose(out_bw, ref, atol=5e-2, rtol=5e-2), (
        f"bf16-W max err {jnp.max(jnp.abs(out_bw - ref))}")

    # 3) Remainder path: n = 15 rows -> over-covered, masked tail block.
    x_odd = jax.random.normal(kx2, (3, 5, D), dtype=jnp.float32)
    out_odd = jax.block_until_ready(
        prenorm_linear(x_odd, gamma, beta, w_in_out, bias))
    ref_odd = reference(x_odd, gamma, beta, w_in_out, bias)
    assert out_odd.shape == (3, 5, D)
    assert jnp.allclose(out_odd, ref_odd, atol=2e-4, rtol=2e-4), (
        f"odd max err {jnp.max(jnp.abs(out_odd - ref_odd))}")

    # 4) bf16 activations in / out (halves the dominant HBM traffic).
    x_bf16 = x.astype(jnp.bfloat16)
    out_bf16 = jax.block_until_ready(
        prenorm_linear(x_bf16, gamma, beta, w_in_out, bias))
    ref_bf16 = reference(x_bf16, gamma, beta, w_in_out, bias)
    assert out_bf16.dtype == jnp.bfloat16
    err = jnp.max(jnp.abs(out_bf16.astype(jnp.float32)
                          - ref_bf16.astype(jnp.float32)))
    assert jnp.allclose(out_bf16.astype(jnp.float32),
                        ref_bf16.astype(jnp.float32),
                        atol=6e-2, rtol=6e-2), f"bf16-x max err {err}"

    print("KERNEL_OK")
</pallas_src>

<mosaic_0001>
module attributes {stable_mosaic.version = 11 : i64} {
  func.func @prenorm_linear_kernel(%arg0: i32, %arg1: memref<8x128xf32, #tpu.memory_space<vmem>>, %arg2: memref<128x128xf32, #tpu.memory_space<vmem>>, %arg3: memref<1x128xf32, #tpu.memory_space<vmem>>, %arg4: memref<8x128xf32, #tpu.memory_space<vmem>>) attributes {dimension_semantics = [#tpu.dimension_semantics<parallel>], iteration_bounds = array<i64: 2>, scalar_prefetch = 0 : i64, scratch_operands = 0 : i64, tpu.core_type = #tpu.core_type<tc>, window_params = [{transform_indices = @transform_0, window_bounds = array<i64: 8, 128>}, {pipeline_mode = #tpu.pipeline_mode<synchronous>, transform_indices = @transform_1, window_bounds = array<i64: 128, 128>}, {pipeline_mode = #tpu.pipeline_mode<synchronous>, transform_indices = @transform_2, window_bounds = array<i64: 1, 128>}, {transform_indices = @transform_3, window_bounds = array<i64: 8, 128>}]} {
    %c0 = arith.constant 0 : index
    %c0_0 = arith.constant 0 : index
    %0 = vector.load %arg1[%c0, %c0_0] : memref<8x128xf32, #tpu.memory_space<vmem>>, vector<8x128xf32>
    %cst = arith.constant dense<0.000000e+00> : vector<8xf32>
    %1 = vector.multi_reduction <add>, %0, %cst [1] : vector<8x128xf32> to vector<8xf32>
    %2 = vector.shape_cast %1 : vector<8xf32> to vector<8x1xf32>
    %cst_1 = arith.constant 7.812500e-03 : f32
    %3 = vector.broadcast %cst_1 : f32 to vector<8x1xf32>
    %4 = arith.mulf %2, %3 : vector<8x1xf32>
    %5 = vector.broadcast %4 : vector<8x1xf32> to vector<8x128xf32>
    %6 = arith.subf %0, %5 : vector<8x128xf32>
    %7 = arith.mulf %6, %6 : vector<8x128xf32>
    %cst_2 = arith.constant dense<0.000000e+00> : vector<8xf32>
    %8 = vector.multi_reduction <add>, %7, %cst_2 [1] : vector<8x128xf32> to vector<8xf32>
    %9 = vector.shape_cast %8 : vector<8xf32> to vector<8x1xf32>
    %cst_3 = arith.constant 7.812500e-03 : f32
    %10 = vector.broadcast %cst_3 : f32 to vector<8x1xf32>
    %11 = arith.mulf %9, %10 : vector<8x1xf32>
    %cst_4 = arith.constant 9.99999974E-6 : f32
    %12 = vector.broadcast %cst_4 : f32 to vector<8x1xf32>
    %13 = arith.addf %11, %12 : vector<8x1xf32>
    %14 = math.rsqrt %13 : vector<8x1xf32>
    %15 = vector.broadcast %14 : vector<8x1xf32> to vector<8x128xf32>
    %16 = arith.mulf %6, %15 : vector<8x128xf32>
    %c0_5 = arith.constant 0 : index
    %c0_6 = arith.constant 0 : index
    %17 = vector.load %arg2[%c0_5, %c0_6] : memref<128x128xf32, #tpu.memory_space<vmem>>, vector<128x128xf32>
    %cst_7 = arith.constant dense<0.000000e+00> : vector<8x128xf32>
    %18 = tpu.matmul %16, %17, %cst_7 {dimension_numbers = #tpu.dot_dimension_numbers<[1], [0], [0], [1], [0, 0, 1, 1], [], []>} : vector<8x128xf32>, vector<128x128xf32>, vector<8x128xf32> -> vector<8x128xf32>
    %c0_8 = arith.constant 0 : index
    %c0_9 = arith.constant 0 : index
    %19 = vector.load %arg3[%c0_8, %c0_9] : memref<1x128xf32, #tpu.memory_space<vmem>>, vector<1x128xf32>
    %20 = vector.broadcast %19 : vector<1x128xf32> to vector<8x128xf32>
    %21 = arith.addf %18, %20 : vector<8x128xf32>
    %c0_10 = arith.constant 0 : index
    %c0_11 = arith.constant 0 : index
    %22 = vector.load %arg4[%c0_10, %c0_11] : memref<8x128xf32, #tpu.memory_space<vmem>>, vector<8x128xf32>
    tpu.vector_store %arg4[%c0_10, %c0_11], %21 {strides = array<i32>} : memref<8x128xf32, #tpu.memory_space<vmem>>, vector<8x128xf32>,
    return
  }
  func.func @transform_0(%arg0: i32) -> (i32, i32) {
    %c0_i32 = arith.constant 0 : i32
    %c0_i32_0 = arith.constant 0 : i32
    return %arg0, %c0_i32 : i32, i32
  }
  func.func @transform_1(%arg0: i32) -> (i32, i32) {
    %c0_i32 = arith.constant 0 : i32
    %c0_i32_0 = arith.constant 0 : i32
    %c0_i32_1 = arith.constant 0 : i32
    return %c0_i32, %c0_i32_0 : i32, i32
  }
  func.func @transform_2(%arg0: i32) -> (i32, i32) {
    %c0_i32 = arith.constant 0 : i32
    %c0_i32_0 = arith.constant 0 : i32
    %c0_i32_1 = arith.constant 0 : i32
    return %c0_i32, %c0_i32_0 : i32, i32
  }
  func.func @transform_3(%arg0: i32) -> (i32, i32) {
    %c0_i32 = arith.constant 0 : i32
    %c0_i32_0 = arith.constant 0 : i32
    return %arg0, %c0_i32 : i32, i32
  }
}

</mosaic_0001>

<llo_original>
// kernel: tpu_custom_call.1
$region0: #{tpu_custom_call.1}
  #allocation0 [shape = 'u32[]', space=smem, size = 0x4, offset = 0x4, fixed_abs, tag = 'smem constant byte address 0x4 - core index']
  #allocation1 [shape = 'u32[72,128]{1,0:T(1,128)}', space=vmem, size = 0x9000, scoped, tag = 'internal scratch']
  %s0 = inlined_call_operand.hbm [shape: f32[16,128], index: 0, kind: input, shape index: {}]
  %s1 = inlined_call_operand.hbm [shape: f32[128,128], index: 1, kind: input, shape index: {}]
  %s2 = inlined_call_operand.vmem [shape: f32[1,128], index: 2, kind: input, shape index: {}]
  %s3 = inlined_call_operand.hbm [shape: f32[16,128], index: 3, kind: output, shape index: {}]
  %s4 = sld [smem:[#allocation0]]
  $region53: #{tpu_custom_call.1} parent=0
    _
  %s6 = ssub.s32 1, %s4
  %s7 = scalar_select 0, %s6, %s4
  $region1: #{tpu_custom_call.1} parent=0
    #allocation2 [shape = 'u8[8192]{0}', space=vmem, size = 0x2000, scoped, tag = 'input window, operand 0']
    #allocation3 [shape = 's32[2]{0}', space=sflag, size = 0x8, scoped, tag = 'scoped memory for tpu_custom_call.1']
    #allocation4 [shape = 's32[2]{0}', space=sflag, size = 0x8, scoped, tag = 'scoped memory for tpu_custom_call.1']
    #allocation5 [shape = 'u8[65536]{0}', space=vmem, size = 0x10000, scoped, tag = 'input window, operand 1, single buffered']
    #allocation6 [shape = 's32[1]{0}', space=sflag, size = 0x4, scoped, tag = 'scoped memory for tpu_custom_call.1']
    #allocation7 [shape = 'u8[8192]{0}', space=vmem, size = 0x2000, scoped, tag = 'output window, operand 0']
    %8 = vsyncpa [#allocation3], 0
    %s9 = scalar_lea.sflag [#allocation3], 1
    %10 = vsyncpa %s9, 0
    %11 = vsyncpa [#allocation6], 0
    %12 = vsyncpa [#allocation4], 0
    %s13 = scalar_lea.sflag [#allocation4], 1
    %14 = vsyncpa %s13, 0
    loop: start=0, step=1, limit=4
    $region2: #{tpu_custom_call.1} parent=1 // loop_pre_header
      _
    $region3: #{tpu_custom_call.1} parent=1 // loop_header
      %s16 = sphi 0, %s20
      %p17 = scmp.ge.s32.totalorder %s16, 4
      %s26 = sphi 0, %s28
      %s29 = sphi 0, %s26
      %s30 = sphi 0, %s29
      %s46 = sphi 0, %s30
      %s50 = sphi 0, %s50
      %s52 = sphi 0, %s50
      %s53 = sphi 0, %s52
      %s67 = sphi 0, %s53
      %s71 = sphi 0, %s71
      %s73 = sphi 0, %s71
      %s74 = sphi 0, %s73
      %s88 = sphi 0, %s74
      %s94 = sphi 0, %s96
      %s97 = sphi 0, %s94
      %s98 = sphi 0, %s97
      %s114 = sphi 0, %s98
    $region4: #{tpu_custom_call.1} parent=1 // loop_header_branch
      %19 = sbr.rel (%p17) target = $region8
    $region5: #{tpu_custom_call.1} parent=1 // loop_body
      %s21 = ssub.s32 %s16, 1
      %s22 = ssub.s32 %s16, 2
      %s23 = sadd.s32 %s16, 1
      %s24 = ssub.s32 %s16, %s23
      %p25 = scmp.eq.s32.totalorder %s24, 0
      %s27 = sadd.s32 %s26, 1
      %s28 = scalar_select %p25, %s26, %s27
      %p31 = pneg %p25
      %p32 = scmp.eq.s32.totalorder %s16, 1
      %p33 = por %p31, %p32
      %p34 = scmp.ne.s32.totalorder %s26, %s29
      %p35 = scmp.eq.s32.totalorder %s16, 0
      %p36 = por %p34, %p35
      %p37 = scmp.ne.s32.totalorder %s26, %s29
      %p38 = scmp.eq.s32.totalorder %s21, 1
      %p39 = por %p37, %p38
      %p40 = scmp.ne.s32.totalorder %s29, %s30
      %p41 = scmp.eq.s32.totalorder %s21, 0
      %p42 = por %p40, %p41
      %p43 = scmp.ne.s32.totalorder %s29, %s30
      %p44 = scmp.eq.s32.totalorder %s22, 1
      %p45 = por %p43, %p44
      %p47 = scmp.ne.s32.totalorder %s30, %s46
      %p48 = scmp.eq.s32.totalorder %s22, 0
      %p49 = por %p47, %p48
      %s51 = sadd.s32 %s50, 1
      %p54 = scmp.eq.s32.totalorder %s16, 1
      %p55 = scmp.ne.s32.totalorder %s50, %s52
      %p56 = scmp.eq.s32.totalorder %s16, 0
      %p57 = por %p55, %p56
      %p58 = scmp.ne.s32.totalorder %s50, %s52
      %p59 = scmp.eq.s32.totalorder %s21, 1
      %p60 = por %p58, %p59
      %p61 = scmp.ne.s32.totalorder %s52, %s53
      %p62 = scmp.eq.s32.totalorder %s21, 0
      %p63 = por %p61, %p62
      %p64 = scmp.ne.s32.totalorder %s52, %s53
      %p65 = scmp.eq.s32.totalorder %s22, 1
      %p66 = por %p64, %p65
      %p68 = scmp.ne.s32.totalorder %s53, %s67
      %p69 = scmp.eq.s32.totalorder %s22, 0
      %p70 = por %p68, %p69
      %s72 = sadd.s32 %s71, 1
      %p75 = scmp.eq.s32.totalorder %s16, 1
      %p76 = scmp.ne.s32.totalorder %s71, %s73
      %p77 = scmp.eq.s32.totalorder %s16, 0
      %p78 = por %p76, %p77
      %p79 = scmp.ne.s32.totalorder %s71, %s73
      %p80 = scmp.eq.s32.totalorder %s21, 1
      %p81 = por %p79, %p80
      %p82 = scmp.ne.s32.totalorder %s73, %s74
      %p83 = scmp.eq.s32.totalorder %s21, 0
      %p84 = por %p82, %p83
      %p85 = scmp.ne.s32.totalorder %s73, %s74
      %p86 = scmp.eq.s32.totalorder %s22, 1
      %p87 = por %p85, %p86
      %p89 = scmp.ne.s32.totalorder %s74, %s88
      %p90 = scmp.eq.s32.totalorder %s22, 0
      %p91 = por %p89, %p90
      %s92 = ssub.s32 %s16, %s23
      %p93 = scmp.eq.s32.totalorder %s92, 0
      %s95 = sadd.s32 %s94, 1
      %s96 = scalar_select %p93, %s94, %s95
      %p99 = pneg %p93
      %p100 = scmp.eq.s32.totalorder %s16, 1
      %p101 = por %p99, %p100
      %p102 = scmp.ne.s32.totalorder %s94, %s97
      %p103 = scmp.eq.s32.totalorder %s16, 0
      %p104 = por %p102, %p103
      %p105 = scmp.ne.s32.totalorder %s94, %s97
      %p106 = scmp.eq.s32.totalorder %s21, 1
      %p107 = por %p105, %p106
      %p108 = scmp.ne.s32.totalorder %s97, %s98
      %p109 = scmp.eq.s32.totalorder %s21, 0
      %p110 = por %p108, %p109
      %p111 = scmp.ne.s32.totalorder %s97, %s98
      %p112 = scmp.eq.s32.totalorder %s22, 1
      %p113 = por %p111, %p112
      %p115 = scmp.ne.s32.totalorder %s98, %s114
      %p116 = scmp.eq.s32.totalorder %s22, 0
      %p117 = por %p115, %p116
      %p118 = scmp.le.s32.totalorder 1, %s16
      %p119 = scmp.lt.s32.totalorder %s16, 3
      %p120 = pnand %p118, %p119
      %p121 = pneg %p120
      // Predicated region
      $region9: #{tpu_custom_call.1} parent=5 // pred_check
        _
      $region10: #{tpu_custom_call.1} parent=5 // pred_check_branch
        %123 = sbr.rel (%p120) target = $region12
      $region11: #{tpu_custom_call.1} parent=5 // pred_region
        %s124 = ssub.s32 %s16, 1
        // Predicated region
        $region13: #{tpu_custom_call.1} parent=11 // pred_check
          %p125 = pneg %p63
        $region14: #{tpu_custom_call.1} parent=11 // pred_check_branch
          %127 = sbr.rel (%p125) target = $region16
        $region15: #{tpu_custom_call.1} parent=11 // pred_region
          %129 = vsyncadd [#allocation6], 0
          %s130 = sshll.u32 %s1, 4
          %s131 = int_to_ptr.hbm [resolvable:$true] %s130
          %s132 = sshll.u32 [#allocation5], 4
          %s133 = int_to_ptr.vmem [resolvable:$true] %s132
          %138 = dma.hbm_to_vmem [thread:$0]  %s131, 2048, %s133, [#allocation6], 128, 128, 8
        $region16: #{tpu_custom_call.1} parent=11 // pred_fallthru
          _
        // Predicated region
        $region17: #{tpu_custom_call.1} parent=11 // pred_check
          %p139 = pneg %p84
        $region18: #{tpu_custom_call.1} parent=11 // pred_check_branch
          %141 = sbr.rel (%p139) target = $region20
        $region19: #{tpu_custom_call.1} parent=11 // pred_region
          _
        $region20: #{tpu_custom_call.1} parent=11 // pred_fallthru
          _
      $region12: #{tpu_custom_call.1} parent=5 // pred_fallthru
        _
      %p142 = scmp.lt.s32.totalorder %s16, 2
      // Predicated region
      $region21: #{tpu_custom_call.1} parent=5 // pred_check
        %p143 = pneg %p142
      $region22: #{tpu_custom_call.1} parent=5 // pred_check_branch
        %145 = sbr.rel (%p143) target = $region24
      $region23: #{tpu_custom_call.1} parent=5 // pred_region
        // Predicated region
        $region25: #{tpu_custom_call.1} parent=23 // pred_check
          %p146 = pneg %p36
        $region26: #{tpu_custom_call.1} parent=23 // pred_check_branch
          %148 = sbr.rel (%p146) target = $region28
        $region27: #{tpu_custom_call.1} parent=23 // pred_region
          %s149 = sand.u32 %s26, 1
          %s150 = scalar_lea.sflag [#allocation3], %s149
          %s151 = sand.u32 %s26, 1
          %s152 = smul.addr %s151, 8
          %s153 = scalar_lea.vmem [#allocation2], %s152
          %155 = vsyncadd %s150, 0
          %s156 = smul.addr %s16, 8
          %s157 = scalar_lea.hbm %s0, %s156
          %s159 = sshll.u32 %s157, 4
          %s160 = int_to_ptr.hbm [resolvable:$true] %s159
          %s161 = sshll.u32 %s153, 4
          %s162 = int_to_ptr.vmem [resolvable:$true] %s161
          %164 = dma.hbm_to_vmem [thread:$0]  %s160, 128, %s162, %s150
        $region28: #{tpu_custom_call.1} parent=23 // pred_fallthru
          _
      $region24: #{tpu_custom_call.1} parent=5 // pred_fallthru
        _
      %p165 = scmp.le.s32.totalorder 1, %s16
      %p166 = scmp.lt.s32.totalorder %s16, 3
      %p167 = pnand %p165, %p166
      %p168 = pneg %p167
      // Predicated region
      $region29: #{tpu_custom_call.1} parent=5 // pred_check
        _
      $region30: #{tpu_custom_call.1} parent=5 // pred_check_branch
        %170 = sbr.rel (%p167) target = $region32
      $region31: #{tpu_custom_call.1} parent=5 // pred_region
        %s171 = ssub.s32 %s16, 1
        %s172 = sand.u32 %s29, 1
        %s173 = scalar_lea.sflag [#allocation3], %s172
        %s174 = sand.u32 %s29, 1
        %s175 = smul.addr %s174, 8
        %s176 = scalar_lea.vmem [#allocation2], %s175
        // Predicated region
        $region33: #{tpu_custom_call.1} parent=31 // pred_check
          %p177 = pneg %p42
        $region34: #{tpu_custom_call.1} parent=31 // pred_check_branch
          %179 = sbr.rel (%p177) target = $region36
        $region35: #{tpu_custom_call.1} parent=31 // pred_region
          %181 = dma.done %s173, 128
        $region36: #{tpu_custom_call.1} parent=31 // pred_fallthru
          _
        // Predicated region
        $region37: #{tpu_custom_call.1} parent=31 // pred_check
          %p182 = pneg %p63
        $region38: #{tpu_custom_call.1} parent=31 // pred_check_branch
          %184 = sbr.rel (%p182) target = $region40
        $region39: #{tpu_custom_call.1} parent=31 // pred_region
          %186 = dma.done [#allocation6], 2048
        $region40: #{tpu_custom_call.1} parent=31 // pred_fallthru
          _
        %s187 = sand.u32 %s29, 1
        %s188 = scalar_lea.sflag [#allocation3], %s187
        %s189 = sand.u32 %s29, 1
        %s190 = smul.addr %s189, 8
        %s191 = scalar_lea.vmem [#allocation2], %s190
        %p192 = pneg %p42
        %p193 = pneg %p39
        %p194 = pneg %p63
        %p195 = pneg %p60
        %p196 = pneg %p84
        %p197 = pneg %p81
        %p198 = pneg %p110
        %p199 = pneg %p107
        %s200 = sand.u32 %s97, 1
        %s201 = scalar_lea.sflag [#allocation4], %s200
        %s202 = sand.u32 %s97, 1
        %s203 = smul.addr %s202, 8
        %s204 = scalar_lea.vmem [#allocation7], %s203
        %v205 = vld [vmem:[%s176] sm:$0xff]
        %206 = vadd.xlane.f32.xlu0 %v205
        %v207 = vpop.xlane.xlu0 %206
        %v208 = vmul.f32 %v207, 0.0078125
        %v209 = vsub.f32 %v205, %v208
        %v210 = vmul.f32 %v209, %v209
        %211 = vadd.xlane.f32.xlu0 %v210
        %v212 = vpop.xlane.xlu0 %211
        %v213 = vmul.f32 %v212, 0.0078125
        %v214 = vadd.f32 %v213, 1e-05
        %v215 = vrsqrt.pop %v214
        %v216 = vmul.f32 %v215, %v214
        %v217 = vmul.f32 %v216, %v215
        %v218 = vmul.f32 0.5, %v217
        %v219 = vsub.f32 1.5, %v218
        %v220 = vmul.f32 %v215, %v219
        %vm221 = vweird.f32 %v214
        %vm222 = vweird.f32 %v215
        %vm223 = vmor %vm221, %vm222
        %v224 = vsel %vm223, %v215, %v220
        %v225 = vmul.f32 %v209, %v224
        %v226 = vld [vmem:[#allocation5] sm:$0xff]
        %v227 = vld [vmem:[#allocation5 + $0x8] sm:$0xff]
        %v228 = vld [vmem:[#allocation5 + $0x10] sm:$0xff]
        %v229 = vld [vmem:[#allocation5 + $0x18] sm:$0xff]
        %v230 = vld [vmem:[#allocation5 + $0x20] sm:$0xff]
        %v231 = vld [vmem:[#allocation5 + $0x28] sm:$0xff]
        %v232 = vld [vmem:[#allocation5 + $0x30] sm:$0xff]
        %v233 = vld [vmem:[#allocation5 + $0x38] sm:$0xff]
        %v234 = vld [vmem:[#allocation5 + $0x40] sm:$0xff]
        %v235 = vld [vmem:[#allocation5 + $0x48] sm:$0xff]
        %v236 = vld [vmem:[#allocation5 + $0x50] sm:$0xff]
        %v237 = vld [vmem:[#allocation5 + $0x58] sm:$0xff]
        %v238 = vld [vmem:[#allocation5 + $0x60] sm:$0xff]
        %v239 = vld [vmem:[#allocation5 + $0x68] sm:$0xff]
        %v240 = vld [vmem:[#allocation5 + $0x70] sm:$0xff]
        %v241 = vld [vmem:[#allocation5 + $0x78] sm:$0xff]
        %v242 = vld [vmem:[%s2] sm:$0x1]
        %v244 = vperm.slane %v242, 0
        %246 = vmatpush.msra.mxu0 %v241
        %247 = vmatpush.msra.mxu0 %v240
        %248 = vmatpush.msra.mxu0 %v239
        %249 = vmatpush.msra.mxu0 %v238
        %250 = vmatpush.msra.mxu0 %v237
        %251 = vmatpush.msra.mxu0 %v236
        %252 = vmatpush.msra.mxu0 %v235
        %253 = vmatpush.msra.mxu0 %v234
        %254 = vmatpush.msra.mxu0 %v233
        %255 = vmatpush.msra.mxu0 %v232
        %256 = vmatpush.msra.mxu0 %v231
        %257 = vmatpush.msra.mxu0 %v230
        %258 = vmatpush.msra.mxu0 %v229
        %259 = vmatpush.msra.mxu0 %v228
        %260 = vmatpush.msra.mxu0 %v227
        %261 = vmatpush.msra.mxu0 %v226
        %262 = vmatmul.f32.gmra.mxu0 %v225
        %v263 = vpop.f32.mrf.mxu0
        %v264 = vadd.f32 %v244, %v263
        %265 = vdwg.mxu0
        %266 = vst [vmem:[%s204] sm:$0xff] %v264
        %s267 = sand.u32 %s97, 1
        %s268 = scalar_lea.sflag [#allocation4], %s267
        %s269 = sand.u32 %s97, 1
        %s270 = smul.addr %s269, 8
        %s271 = scalar_lea.vmem [#allocation7], %s270
        // Predicated region
        $region41: #{tpu_custom_call.1} parent=31 // pred_check
          %p272 = pneg %p107
        $region42: #{tpu_custom_call.1} parent=31 // pred_check_branch
          %274 = sbr.rel (%p272) target = $region44
        $region43: #{tpu_custom_call.1} parent=31 // pred_region
          %276 = vsyncadd %s268, 0
          %s277 = smul.addr %s21, 8
          %s278 = scalar_lea.hbm %s3, %s277
          %s280 = sshll.u32 %s271, 4
          %s281 = int_to_ptr.vmem [resolvable:$true] %s280
          %s282 = sshll.u32 %s278, 4
          %s283 = int_to_ptr.hbm [resolvable:$true] %s282
          %285 = dma.vmem_to_hbm [thread:$0]  %s281, 128, %s283, %s268
        $region44: #{tpu_custom_call.1} parent=31 // pred_fallthru
          _
      $region32: #{tpu_custom_call.1} parent=5 // pred_fallthru
        _
      %p286 = scmp.le.s32.totalorder 2, %s16
      // Predicated region
      $region45: #{tpu_custom_call.1} parent=5 // pred_check
        %p287 = pneg %p286
      $region46: #{tpu_custom_call.1} parent=5 // pred_check_branch
        %289 = sbr.rel (%p287) target = $region48
      $region47: #{tpu_custom_call.1} parent=5 // pred_region
        %s290 = ssub.s32 %s16, 2
        // Predicated region
        $region49: #{tpu_custom_call.1} parent=47 // pred_check
          %p291 = pneg %p113
        $region50: #{tpu_custom_call.1} parent=47 // pred_check_branch
          %293 = sbr.rel (%p291) target = $region52
        $region51: #{tpu_custom_call.1} parent=47 // pred_region
          %s294 = sand.u32 %s98, 1
          %s295 = scalar_lea.sflag [#allocation4], %s294
          %s296 = sand.u32 %s98, 1
          %s297 = smul.addr %s296, 8
          %s298 = scalar_lea.vmem [#allocation7], %s297
          %300 = dma.done %s295, 128
        $region52: #{tpu_custom_call.1} parent=47 // pred_fallthru
          _
      $region48: #{tpu_custom_call.1} parent=5 // pred_fallthru
        _
    $region6: #{tpu_custom_call.1} parent=1 // loop_footer
      %s20 = sadd.s32 1, %s16
    $region7: #{tpu_custom_call.1} parent=1 // loop_footer_branch
      %15 = sbr.rel target = $region3
    $region8: #{tpu_custom_call.1} parent=1 // loop_exit
      _
    %301 = vsyncpa [#allocation3], 1
    %s302 = scalar_lea.sflag [#allocation3], 1
    %303 = vsyncpa %s302, 1
    %304 = vsyncpa [#allocation6], 1
    %305 = vsyncpa [#allocation4], 1
    %s306 = scalar_lea.sflag [#allocation4], 1
    %307 = vsyncpa %s306, 1

</llo_original>
